<compile_context>
chip_gen: v7x
topology: tpu7x:2x2x1
jax: 0.10.0
libtpu: 0.0.40
codegen_flags: <defaults>
</compile_context>

<pallas_src>
import functools
import math

import jax
import jax.numpy as jnp
from jax import lax
from jax.experimental import pallas as pl
from jax.experimental.pallas import tpu as pltpu


def _round_up(x, m):
    return ((x + m - 1) // m) * m


def _lm_head_kernel(feat_ref, wd_ref, bd_ref, gamma_ref, beta_ref,
                    wdec_ref, bdec_ref, out_ref, hs_ref, *, eps):
    """One (row-tile i, core-split c, vocab-tile j) grid cell.

    feat_ref : (tm, H)   row tile of flattened features (compute dtype)
    wd_ref   : (H, H)    dense weight (in, out), resident across the grid
    bd_ref   : (1, H)    dense bias (f32)
    gamma_ref: (1, H)    layernorm weight (f32)
    beta_ref : (1, H)    layernorm bias (f32)
    wdec_ref : (H, tn)   decoder weight tile (in, out-tile)
    bdec_ref : (1, tn)   decoder (tied) bias tile (f32)
    out_ref  : (tm, tn)  logits tile
    hs_ref   : (tm, H)   scratch in the MXU input dtype: normalized hidden
                         state, computed once per (i, c) at j == 0 and reused
                         for every vocab tile j.
    """

    @pl.when(pl.program_id(2) == 0)
    def _compute_hidden():
        # dense: native-dtype operands straight to the MXU, f32 accumulate
        h = jnp.dot(feat_ref[...], wd_ref[...],
                    preferred_element_type=jnp.float32)
        h = h + bd_ref[...].astype(jnp.float32)

        # exact GELU (erf form, matches HF RoBERTa / torch gelu default)
        h = 0.5 * h * (1.0 + lax.erf(h * jnp.float32(1.0 / math.sqrt(2.0))))

        # LayerNorm over the hidden (last) axis, all in f32
        mean = jnp.mean(h, axis=-1, keepdims=True)
        var = jnp.mean((h - mean) * (h - mean), axis=-1, keepdims=True)
        hn = (h - mean) * lax.rsqrt(var + jnp.float32(eps))
        hn = (hn * gamma_ref[...].astype(jnp.float32)
              + beta_ref[...].astype(jnp.float32))
        # single down-cast to the MXU dtype; no per-j re-cast needed
        hs_ref[...] = hn.astype(hs_ref.dtype)

    # decoder matmul for this vocab tile (+ tied bias), reading cached hs
    logits = jnp.dot(hs_ref[...], wdec_ref[...],
                     preferred_element_type=jnp.float32)
    logits = logits + bdec_ref[...].astype(jnp.float32)
    out_ref[...] = logits.astype(out_ref.dtype)


def _vmem_capacity_bytes():
    """Physical VMEM of the current chip (64 MiB v7x, 128 MiB v5e/v6e)."""
    try:
        return int(pltpu.get_tpu_info().vmem_capacity_bytes)
    except Exception:  # pragma: no cover - conservative fallback
        return 128 * 1024 * 1024


def prepare_params(params, *, tn=1024, compute_dtype=jnp.bfloat16):
    """One-time parameter preparation: dtype cast + vocab padding.

    Done once (not per forward call) so the ~H*V decoder weight is not copied
    through HBM on every step just for padding/casting.
    """
    H, V = params["decoder_w"].shape
    tn = min(tn, _round_up(V, 128))
    Vp = _round_up(V, tn)

    wdec = params["decoder_w"].astype(compute_dtype)
    bdec = params["decoder_b"].astype(jnp.float32)
    if Vp != V:
        wdec = jnp.pad(wdec, ((0, 0), (0, Vp - V)))
        bdec = jnp.pad(bdec, (0, Vp - V))

    return {
        "dense_w": params["dense_w"].astype(compute_dtype),       # (H, H) in,out
        "dense_b": params["dense_b"].astype(jnp.float32).reshape(1, H),
        "ln_gamma": params["ln_gamma"].astype(jnp.float32).reshape(1, H),
        "ln_beta": params["ln_beta"].astype(jnp.float32).reshape(1, H),
        "decoder_w": wdec,                                         # (H, Vp)
        "decoder_b": bdec.reshape(1, Vp),
        "vocab_size": V,
        "tn": tn,
        "compute_dtype": compute_dtype,
    }


def roberta_lm_head(features, prepared, *, eps=1e-5, tm=512):
    """features: (B, S, H) -> logits (B, S, V).  `prepared` from prepare_params."""
    B, S, H = features.shape
    V = prepared["vocab_size"]
    Vp = prepared["decoder_w"].shape[1]
    tn = prepared["tn"]
    cdtype = prepared["compute_dtype"]
    M = B * S

    cbytes = jnp.dtype(cdtype).itemsize
    obytes = jnp.dtype(features.dtype).itemsize

    # Row tile: large (MXU-friendly multiple) but clipped for small problems.
    tm = min(tm, _round_up(M, 16))

    # Double-buffered VMEM working-set estimate; clamp tiles to the chip budget.
    capacity = _vmem_capacity_bytes()
    budget = capacity - 12 * 1024 * 1024          # headroom for internal scratch

    def working_set(tm_, tn_):
        return (2 * (tm_ * H * cbytes             # feature tile
                     + H * H * cbytes             # dense weight (resident)
                     + H * tn_ * cbytes           # decoder weight tile
                     + tm_ * tn_ * obytes         # output tile
                     + (3 * H + tn_) * 4)         # biases / LN params
                + tm_ * H * cbytes)               # hs scratch

    while working_set(tm, tn) > budget and tn > 128:
        tn //= 2                                  # Vp stays divisible (power-of-2 halving)
    while working_set(tm, tn) > budget and tm > 16:
        tm //= 2

    Mp = _round_up(M, tm)
    nm = Mp // tm
    nj_total = Vp // tn
    # v7x (2 TCs/chip): with a single row tile, split the vocab range over a
    # second *parallel* axis so both cores get work (hidden recomputed per core).
    nc = 2 if (nm == 1 and nj_total >= 2 and nj_total % 2 == 0) else 1
    nj = nj_total // nc

    feats2d = features.reshape(M, H).astype(cdtype)
    if Mp != M:
        feats2d = jnp.pad(feats2d, ((0, Mp - M), (0, 0)))

    vmem_limit = min(max(48 * 1024 * 1024, int(1.25 * working_set(tm, tn))),
                     budget)

    cost = pl.CostEstimate(
        flops=2 * Mp * nc * H * H + 2 * Mp * H * Vp,
        transcendentals=Mp * nc * H,
        bytes_accessed=int(
            Mp * H * cbytes                       # features (once per row tile)
            + H * H * cbytes                      # dense weight (resident)
            + nm * H * Vp * cbytes                # decoder weight re-streamed per row tile
            + (3 * H + Vp) * 4                    # biases / LN params
            + Mp * Vp * obytes),                  # logits written once
    )

    kernel = functools.partial(_lm_head_kernel, eps=eps)

    out = pl.pallas_call(
        kernel,
        out_shape=jax.ShapeDtypeStruct((Mp, Vp), features.dtype),
        grid_spec=pltpu.PrefetchScalarGridSpec(
            num_scalar_prefetch=0,
            grid=(nm, nc, nj),
            in_specs=[
                pl.BlockSpec((tm, H), lambda i, c, j: (i, 0)),            # features
                pl.BlockSpec((H, H), lambda i, c, j: (0, 0)),             # dense weight
                pl.BlockSpec((1, H), lambda i, c, j: (0, 0)),             # dense bias
                pl.BlockSpec((1, H), lambda i, c, j: (0, 0)),             # ln gamma
                pl.BlockSpec((1, H), lambda i, c, j: (0, 0)),             # ln beta
                pl.BlockSpec((H, tn), lambda i, c, j: (0, c * nj + j)),   # decoder W tile
                pl.BlockSpec((1, tn), lambda i, c, j: (0, c * nj + j)),   # decoder bias tile
            ],
            out_specs=pl.BlockSpec((tm, tn), lambda i, c, j: (i, c * nj + j)),
            scratch_shapes=[pltpu.VMEM((tm, H), cdtype)],
        ),
        compiler_params=pltpu.CompilerParams(
            dimension_semantics=("parallel", "parallel", "arbitrary"),
            vmem_limit_bytes=vmem_limit),
        cost_estimate=cost,
    )(feats2d, prepared["dense_w"], prepared["dense_b"],
      prepared["ln_gamma"], prepared["ln_beta"],
      prepared["decoder_w"], prepared["decoder_b"])

    return out[:M, :V].reshape(B, S, V)


def init_params(key, hidden, vocab):
    """Deterministic synthetic parameters matching the module's __init__ shapes."""
    k1, k2, k3 = jax.random.split(key, 3)
    scale_h = 1.0 / math.sqrt(hidden)
    return {
        # stored as (in, out): PyTorch Linear weight (out, in) transposed
        "dense_w": jax.random.uniform(k1, (hidden, hidden), jnp.float32,
                                      -scale_h, scale_h),
        "dense_b": jax.random.uniform(k2, (hidden,), jnp.float32,
                                      -scale_h, scale_h),
        "ln_gamma": jnp.ones((hidden,), jnp.float32),
        "ln_beta": jnp.zeros((hidden,), jnp.float32),
        "decoder_w": jax.random.uniform(k3, (hidden, vocab), jnp.float32,
                                        -scale_h, scale_h),
        # self.bias = nn.Parameter(torch.zeros(vocab_size)); tied to decoder.bias
        "decoder_b": jnp.zeros((vocab,), jnp.float32),
    }


def _reference(features, params, eps=1e-5, compute_dtype=jnp.bfloat16):
    """Mixed-precision-matched reference (bf16 MXU operands, f32 accumulate/math)."""
    f32 = jnp.float32
    x = features.astype(compute_dtype).astype(f32)
    wd = params["dense_w"].astype(compute_dtype).astype(f32)
    x = x @ wd + params["dense_b"]
    x = 0.5 * x * (1.0 + lax.erf(x * (1.0 / math.sqrt(2.0))))
    mean = jnp.mean(x, axis=-1, keepdims=True)
    var = jnp.mean((x - mean) ** 2, axis=-1, keepdims=True)
    hs = (x - mean) * lax.rsqrt(var + f32(eps))
    hs = hs * params["ln_gamma"] + params["ln_beta"]
    hs = hs.astype(compute_dtype).astype(f32)
    wdec = params["decoder_w"].astype(compute_dtype).astype(f32)
    return hs @ wdec + params["decoder_b"]


if __name__ == "__main__":
    # Small shapes; S and V deliberately NOT tile multiples to exercise the
    # padding / non-divisible path.
    B, S, H, V = 2, 7, 128, 250
    key = jax.random.PRNGKey(0)
    kf, kp = jax.random.split(key)
    features = jax.random.normal(kf, (B, S, H), jnp.float32)
    params = init_params(kp, H, V)

    # One-time prep: bf16 cast + vocab padding (hoisted out of the forward).
    prepared = prepare_params(params, tn=1024, compute_dtype=jnp.bfloat16)

    logits = roberta_lm_head(features, prepared, eps=1e-5)
    logits = jax.block_until_ready(logits)

    ref = _reference(features, params, eps=1e-5, compute_dtype=jnp.bfloat16)
    assert logits.shape == (B, S, V)
    # bf16 MXU operands with f32 accumulation; tolerance reflects that.
    assert jnp.allclose(logits, ref, atol=1e-2, rtol=1e-2), "mismatch vs reference"

    # TODO(synk): return_keywords_reps=True (dict with hidden_states) not exposed;
    # the kernel returns logits only, matching the default forward path.
    print("KERNEL_OK")
</pallas_src>

<mosaic_0001>
module attributes {stable_mosaic.version = 11 : i64} {
  func.func @_lm_head_kernel(%arg0: i32, %arg1: i32, %arg2: i32, %arg3: memref<16x128xbf16, #tpu.memory_space<vmem>>, %arg4: memref<128x128xbf16, #tpu.memory_space<vmem>>, %arg5: memref<1x128xf32, #tpu.memory_space<vmem>>, %arg6: memref<1x128xf32, #tpu.memory_space<vmem>>, %arg7: memref<1x128xf32, #tpu.memory_space<vmem>>, %arg8: memref<128x256xbf16, #tpu.memory_space<vmem>>, %arg9: memref<1x256xf32, #tpu.memory_space<vmem>>, %arg10: memref<16x256xf32, #tpu.memory_space<vmem>>, %arg11: memref<16x128xbf16, #tpu.memory_space<vmem>>) attributes {dimension_semantics = [#tpu.dimension_semantics<parallel>, #tpu.dimension_semantics<parallel>, #tpu.dimension_semantics<arbitrary>], iteration_bounds = array<i64: 1, 1, 1>, scalar_prefetch = 0 : i64, scratch_operands = 1 : i64, tpu.core_type = #tpu.core_type<tc>, window_params = [{transform_indices = @transform_0, window_bounds = array<i64: 16, 128>}, {pipeline_mode = #tpu.pipeline_mode<synchronous>, transform_indices = @transform_1, window_bounds = array<i64: 128, 128>}, {pipeline_mode = #tpu.pipeline_mode<synchronous>, transform_indices = @transform_2, window_bounds = array<i64: 1, 128>}, {pipeline_mode = #tpu.pipeline_mode<synchronous>, transform_indices = @transform_3, window_bounds = array<i64: 1, 128>}, {pipeline_mode = #tpu.pipeline_mode<synchronous>, transform_indices = @transform_4, window_bounds = array<i64: 1, 128>}, {transform_indices = @transform_5, window_bounds = array<i64: 128, 256>}, {transform_indices = @transform_6, window_bounds = array<i64: 1, 256>}, {transform_indices = @transform_7, window_bounds = array<i64: 16, 256>}]} {
    %c0_i32 = arith.constant 0 : i32
    %0 = arith.cmpi eq, %arg2, %c0_i32 : i32
    %1 = arith.extui %0 : i1 to i32
    %c0_i32_0 = arith.constant 0 : i32
    %2 = arith.cmpi ne, %1, %c0_i32_0 : i32
    scf.if %2 {
      %c0_8 = arith.constant 0 : index
      %c0_9 = arith.constant 0 : index
      %10 = vector.load %arg3[%c0_8, %c0_9] : memref<16x128xbf16, #tpu.memory_space<vmem>>, vector<16x128xbf16>
      %c0_10 = arith.constant 0 : index
      %c0_11 = arith.constant 0 : index
      %11 = vector.load %arg4[%c0_10, %c0_11] : memref<128x128xbf16, #tpu.memory_space<vmem>>, vector<128x128xbf16>
      %cst_12 = arith.constant dense<0.000000e+00> : vector<16x128xf32>
      %12 = tpu.matmul %10, %11, %cst_12 {dimension_numbers = #tpu.dot_dimension_numbers<[1], [0], [0], [1], [0, 0, 1, 1], [], []>} : vector<16x128xbf16>, vector<128x128xbf16>, vector<16x128xf32> -> vector<16x128xf32>
      %c0_13 = arith.constant 0 : index
      %c0_14 = arith.constant 0 : index
      %13 = vector.load %arg5[%c0_13, %c0_14] : memref<1x128xf32, #tpu.memory_space<vmem>>, vector<1x128xf32>
      %14 = vector.broadcast %13 : vector<1x128xf32> to vector<16x128xf32>
      %15 = arith.addf %12, %14 : vector<16x128xf32>
      %cst_15 = arith.constant 5.000000e-01 : f32
      %16 = vector.broadcast %cst_15 : f32 to vector<16x128xf32>
      %17 = arith.mulf %16, %15 : vector<16x128xf32>
      %cst_16 = arith.constant 0.707106769 : f32
      %18 = vector.broadcast %cst_16 : f32 to vector<16x128xf32>
      %19 = arith.mulf %15, %18 : vector<16x128xf32>
      %20 = math.erf %19 : vector<16x128xf32>
      %cst_17 = arith.constant 1.000000e+00 : f32
      %21 = vector.broadcast %cst_17 : f32 to vector<16x128xf32>
      %22 = arith.addf %21, %20 : vector<16x128xf32>
      %23 = arith.mulf %17, %22 : vector<16x128xf32>
      %cst_18 = arith.constant dense<0.000000e+00> : vector<16xf32>
      %24 = vector.multi_reduction <add>, %23, %cst_18 [1] : vector<16x128xf32> to vector<16xf32>
      %25 = vector.shape_cast %24 : vector<16xf32> to vector<16x1xf32>
      %cst_19 = arith.constant 1.280000e+02 : f32
      %26 = vector.broadcast %cst_19 : f32 to vector<16x1xf32>
      %27 = arith.divf %25, %26 : vector<16x1xf32>
      %28 = vector.broadcast %27 : vector<16x1xf32> to vector<16x128xf32>
      %29 = arith.subf %23, %28 : vector<16x128xf32>
      %30 = vector.broadcast %27 : vector<16x1xf32> to vector<16x128xf32>
      %31 = arith.subf %23, %30 : vector<16x128xf32>
      %32 = arith.mulf %29, %31 : vector<16x128xf32>
      %cst_20 = arith.constant dense<0.000000e+00> : vector<16xf32>
      %33 = vector.multi_reduction <add>, %32, %cst_20 [1] : vector<16x128xf32> to vector<16xf32>
      %34 = vector.shape_cast %33 : vector<16xf32> to vector<16x1xf32>
      %cst_21 = arith.constant 1.280000e+02 : f32
      %35 = vector.broadcast %cst_21 : f32 to vector<16x1xf32>
      %36 = arith.divf %34, %35 : vector<16x1xf32>
      %37 = vector.broadcast %27 : vector<16x1xf32> to vector<16x128xf32>
      %38 = arith.subf %23, %37 : vector<16x128xf32>
      %cst_22 = arith.constant 9.99999974E-6 : f32
      %39 = vector.broadcast %cst_22 : f32 to vector<16x1xf32>
      %40 = arith.addf %36, %39 : vector<16x1xf32>
      %41 = math.rsqrt %40 : vector<16x1xf32>
      %42 = vector.broadcast %41 : vector<16x1xf32> to vector<16x128xf32>
      %43 = arith.mulf %38, %42 : vector<16x128xf32>
      %c0_23 = arith.constant 0 : index
      %c0_24 = arith.constant 0 : index
      %44 = vector.load %arg6[%c0_23, %c0_24] : memref<1x128xf32, #tpu.memory_space<vmem>>, vector<1x128xf32>
      %45 = vector.broadcast %44 : vector<1x128xf32> to vector<16x128xf32>
      %46 = arith.mulf %43, %45 : vector<16x128xf32>
      %c0_25 = arith.constant 0 : index
      %c0_26 = arith.constant 0 : index
      %47 = vector.load %arg7[%c0_25, %c0_26] : memref<1x128xf32, #tpu.memory_space<vmem>>, vector<1x128xf32>
      %48 = vector.broadcast %47 : vector<1x128xf32> to vector<16x128xf32>
      %49 = arith.addf %46, %48 : vector<16x128xf32>
      %50 = arith.truncf %49 : vector<16x128xf32> to vector<16x128xbf16>
      %c0_27 = arith.constant 0 : index
      %c0_28 = arith.constant 0 : index
      %51 = vector.load %arg11[%c0_27, %c0_28] : memref<16x128xbf16, #tpu.memory_space<vmem>>, vector<16x128xbf16>
      tpu.vector_store %arg11[%c0_27, %c0_28], %50 {strides = array<i32>} : memref<16x128xbf16, #tpu.memory_space<vmem>>, vector<16x128xbf16>,
    } else {
    }
    %c0 = arith.constant 0 : index
    %c0_1 = arith.constant 0 : index
    %3 = vector.load %arg11[%c0, %c0_1] : memref<16x128xbf16, #tpu.memory_space<vmem>>, vector<16x128xbf16>
    %c0_2 = arith.constant 0 : index
    %c0_3 = arith.constant 0 : index
    %4 = vector.load %arg8[%c0_2, %c0_3] : memref<128x256xbf16, #tpu.memory_space<vmem>>, vector<128x256xbf16>
    %cst = arith.constant dense<0.000000e+00> : vector<16x256xf32>
    %5 = tpu.matmul %3, %4, %cst {dimension_numbers = #tpu.dot_dimension_numbers<[1], [0], [0], [1], [0, 0, 1, 1], [], []>} : vector<16x128xbf16>, vector<128x256xbf16>, vector<16x256xf32> -> vector<16x256xf32>
    %c0_4 = arith.constant 0 : index
    %c0_5 = arith.constant 0 : index
    %6 = vector.load %arg9[%c0_4, %c0_5] : memref<1x256xf32, #tpu.memory_space<vmem>>, vector<1x256xf32>
    %7 = vector.broadcast %6 : vector<1x256xf32> to vector<16x256xf32>
    %8 = arith.addf %5, %7 : vector<16x256xf32>
    %c0_6 = arith.constant 0 : index
    %c0_7 = arith.constant 0 : index
    %9 = vector.load %arg10[%c0_6, %c0_7] : memref<16x256xf32, #tpu.memory_space<vmem>>, vector<16x256xf32>
    tpu.vector_store %arg10[%c0_6, %c0_7], %8 {strides = array<i32>} : memref<16x256xf32, #tpu.memory_space<vmem>>, vector<16x256xf32>,
    return
  }
  func.func @transform_0(%arg0: i32, %arg1: i32, %arg2: i32) -> (i32, i32) {
    %c0_i32 = arith.constant 0 : i32
    %c0_i32_0 = arith.constant 0 : i32
    return %arg0, %c0_i32 : i32, i32
  }
  func.func @transform_1(%arg0: i32, %arg1: i32, %arg2: i32) -> (i32, i32) {
    %c0_i32 = arith.constant 0 : i32
    %c0_i32_0 = arith.constant 0 : i32
    %c0_i32_1 = arith.constant 0 : i32
    return %c0_i32, %c0_i32_0 : i32, i32
  }
  func.func @transform_2(%arg0: i32, %arg1: i32, %arg2: i32) -> (i32, i32) {
    %c0_i32 = arith.constant 0 : i32
    %c0_i32_0 = arith.constant 0 : i32
    %c0_i32_1 = arith.constant 0 : i32
    return %c0_i32, %c0_i32_0 : i32, i32
  }
  func.func @transform_3(%arg0: i32, %arg1: i32, %arg2: i32) -> (i32, i32) {
    %c0_i32 = arith.constant 0 : i32
    %c0_i32_0 = arith.constant 0 : i32
    %c0_i32_1 = arith.constant 0 : i32
    return %c0_i32, %c0_i32_0 : i32, i32
  }
  func.func @transform_4(%arg0: i32, %arg1: i32, %arg2: i32) -> (i32, i32) {
    %c0_i32 = arith.constant 0 : i32
    %c0_i32_0 = arith.constant 0 : i32
    %c0_i32_1 = arith.constant 0 : i32
    return %c0_i32, %c0_i32_0 : i32, i32
  }
  func.func @transform_5(%arg0: i32, %arg1: i32, %arg2: i32) -> (i32, i32) {
    %c1_i32 = arith.constant 1 : i32
    %0 = arith.muli %arg1, %c1_i32 : i32
    %1 = arith.addi %0, %arg2 : i32
    %c0_i32 = arith.constant 0 : i32
    %c0_i32_0 = arith.constant 0 : i32
    return %c0_i32, %1 : i32, i32
  }
  func.func @transform_6(%arg0: i32, %arg1: i32, %arg2: i32) -> (i32, i32) {
    %c1_i32 = arith.constant 1 : i32
    %0 = arith.muli %arg1, %c1_i32 : i32
    %1 = arith.addi %0, %arg2 : i32
    %c0_i32 = arith.constant 0 : i32
    %c0_i32_0 = arith.constant 0 : i32
    return %c0_i32, %1 : i32, i32
  }
  func.func @transform_7(%arg0: i32, %arg1: i32, %arg2: i32) -> (i32, i32) {
    %c1_i32 = arith.constant 1 : i32
    %0 = arith.muli %arg1, %c1_i32 : i32
    %1 = arith.addi %0, %arg2 : i32
    %c0_i32 = arith.constant 0 : i32
    return %arg0, %1 : i32, i32
  }
}

</mosaic_0001>

<llo_original>
// kernel: tpu_custom_call.1
$region0: #{tpu_custom_call.1}
  #allocation0 [shape = 'u32[]', space=smem, size = 0x4, offset = 0x4, fixed_abs, tag = 'smem constant byte address 0x4 - core index']
  #allocation1 [shape = 'u32[144,128]{1,0:T(1,128)}', space=vmem, size = 0x12000, scoped, tag = 'internal scratch']
  #allocation2 [shape = 'bf16[16,128]{1,0:T(16,128)(2,1)}', space=vmem, size = 0x1000, scoped, tag = 'scratch operand']
  %s0 = inlined_call_operand.hbm [shape: bf16[16,128], index: 0, kind: input, shape index: {}]
  %s1 = inlined_call_operand.hbm [shape: bf16[128,128], index: 1, kind: input, shape index: {}]
  %s2 = inlined_call_operand.vmem [shape: f32[1,128], index: 2, kind: input, shape index: {}]
  %s3 = inlined_call_operand.vmem [shape: f32[1,128], index: 3, kind: input, shape index: {}]
  %s4 = inlined_call_operand.vmem [shape: f32[1,128], index: 4, kind: input, shape index: {}]
  %s5 = inlined_call_operand.hbm [shape: bf16[128,256], index: 5, kind: input, shape index: {}]
  %s6 = inlined_call_operand.vmem [shape: f32[1,256], index: 6, kind: input, shape index: {}]
  %s7 = inlined_call_operand.hbm [shape: f32[16,256], index: 7, kind: output, shape index: {}]
  %s8 = sld [smem:[#allocation0]]
  $region54: #{tpu_custom_call.1} parent=0
    _
  %s10 = ssub.s32 1, %s8
  %s11 = scalar_select 0, %s10, %s8
  $region1: #{tpu_custom_call.1} parent=0
    #allocation3 [shape = 'u8[4096]{0}', space=vmem, size = 0x1000, scoped, tag = 'input window, operand 0, single buffered']
    #allocation4 [shape = 's32[1]{0}', space=sflag, size = 0x4, scoped, tag = 'scoped memory for tpu_custom_call.1']
    #allocation5 [shape = 's32[1]{0}', space=sflag, size = 0x4, scoped, tag = 'scoped memory for tpu_custom_call.1']
    #allocation6 [shape = 'u8[32768]{0}', space=vmem, size = 0x8000, scoped, tag = 'input window, operand 1, single buffered']
    #allocation7 [shape = 's32[1]{0}', space=sflag, size = 0x4, scoped, tag = 'scoped memory for tpu_custom_call.1']
    #allocation8 [shape = 'u8[65536]{0}', space=vmem, size = 0x10000, scoped, tag = 'input window, operand 5, single buffered']
    #allocation9 [shape = 'u8[16384]{0}', space=vmem, size = 0x4000, scoped, tag = 'output window, operand 0, single buffered']
    %12 = vsyncpa [#allocation4], 0
    %13 = vsyncpa [#allocation7], 0
    %14 = vsyncpa [#allocation5], 0
    // Predicated region
    $region2: #{tpu_custom_call.1} parent=1 // pred_check
      _
    $region3: #{tpu_custom_call.1} parent=1 // pred_check_branch
      %16 = sbr.rel (0) target = $region5
    $region4: #{tpu_custom_call.1} parent=1 // pred_region
      %s18 = ssub.s32 128, 128
      %19 = vsyncadd [#allocation4], %s18
      %s20 = sshll.u32 [#allocation3], 4
      %s21 = int_to_ptr.vmem [resolvable:$true] %s20
      %26 = dma.hbm_to_vmem [thread:$0]  %s0, 128, %s21, [#allocation4], 64, 64, 4
    $region5: #{tpu_custom_call.1} parent=1 // pred_fallthru
      _
    // Predicated region
    $region6: #{tpu_custom_call.1} parent=1 // pred_check
      _
    $region7: #{tpu_custom_call.1} parent=1 // pred_check_branch
      %28 = sbr.rel (0) target = $region9
    $region8: #{tpu_custom_call.1} parent=1 // pred_region
      %s30 = ssub.s32 1024, 1024
      %31 = vsyncadd [#allocation7], %s30
      %s32 = sshll.u32 [#allocation6], 4
      %s33 = int_to_ptr.vmem [resolvable:$true] %s32
      %38 = dma.hbm_to_vmem [thread:$0]  %s1, 1024, %s33, [#allocation7], 64, 64, 4
    $region9: #{tpu_custom_call.1} parent=1 // pred_fallthru
      _
    // Predicated region
    $region10: #{tpu_custom_call.1} parent=1 // pred_check
      _
    $region11: #{tpu_custom_call.1} parent=1 // pred_check_branch
      %40 = sbr.rel (0) target = $region13
    $region12: #{tpu_custom_call.1} parent=1 // pred_region
      _
    $region13: #{tpu_custom_call.1} parent=1 // pred_fallthru
      _
    // Predicated region
    $region14: #{tpu_custom_call.1} parent=1 // pred_check
      _
    $region15: #{tpu_custom_call.1} parent=1 // pred_check_branch
      %42 = sbr.rel (0) target = $region17
    $region16: #{tpu_custom_call.1} parent=1 // pred_region
      _
    $region17: #{tpu_custom_call.1} parent=1 // pred_fallthru
      _
    // Predicated region
    $region18: #{tpu_custom_call.1} parent=1 // pred_check
      _
    $region19: #{tpu_custom_call.1} parent=1 // pred_check_branch
      %44 = sbr.rel (0) target = $region21
    $region20: #{tpu_custom_call.1} parent=1 // pred_region
      _
    $region21: #{tpu_custom_call.1} parent=1 // pred_fallthru
      _
    // Predicated region
    $region22: #{tpu_custom_call.1} parent=1 // pred_check
      _
    $region23: #{tpu_custom_call.1} parent=1 // pred_check_branch
      %46 = sbr.rel (0) target = $region25
    $region24: #{tpu_custom_call.1} parent=1 // pred_region
      %s47 = sadd.s32 0, 0
      %s48 = smul.u32 2, %s47
      %s50 = ssub.s32 2048, 2048
      %51 = vsyncadd [#allocation7], %s50
      %s52 = smul.addr %s48, 64
      %s53 = scalar_lea.hbm %s5, %s52
      %s54 = sshll.u32 [#allocation8], 4
      %s55 = int_to_ptr.vmem [resolvable:$true] %s54
      %60 = dma.hbm_to_vmem [thread:$0]  %s53, 2048, %s55, [#allocation7], 128, 128, 8
    $region25: #{tpu_custom_call.1} parent=1 // pred_fallthru
      _
    // Predicated region
    $region26: #{tpu_custom_call.1} parent=1 // pred_check
      _
    $region27: #{tpu_custom_call.1} parent=1 // pred_check_branch
      %62 = sbr.rel (0) target = $region29
    $region28: #{tpu_custom_call.1} parent=1 // pred_region
      %s63 = sadd.s32 0, 0
      %s64 = smul.u32 2, %s63
      %p65 = scmp.lt.s32.totalorder %s64, 1
      %s66 = scalar_select %p65, %s64, 1
      %s67 = scalar_lea.vmem %s6, %s66
      %s68 = sadd.s32 0, 0
      %s69 = smul.u32 2, %s68
    $region29: #{tpu_custom_call.1} parent=1 // pred_fallthru
      _
    // Predicated region
    $region30: #{tpu_custom_call.1} parent=1 // pred_check
      _
    $region31: #{tpu_custom_call.1} parent=1 // pred_check_branch
      %71 = sbr.rel (0) target = $region33
    $region32: #{tpu_custom_call.1} parent=1 // pred_region
      %72 = dma.done [#allocation4], 128
    $region33: #{tpu_custom_call.1} parent=1 // pred_fallthru
      _
    // Predicated region
    $region34: #{tpu_custom_call.1} parent=1 // pred_check
      _
    $region35: #{tpu_custom_call.1} parent=1 // pred_check_branch
      %74 = sbr.rel (0) target = $region37
    $region36: #{tpu_custom_call.1} parent=1 // pred_region
      %75 = dma.done [#allocation7], 1024
    $region37: #{tpu_custom_call.1} parent=1 // pred_fallthru
      _
    // Predicated region
    $region38: #{tpu_custom_call.1} parent=1 // pred_check
      _
    $region39: #{tpu_custom_call.1} parent=1 // pred_check_branch
      %77 = sbr.rel (0) target = $region41
    $region40: #{tpu_custom_call.1} parent=1 // pred_region
      %78 = dma.done [#allocation7], 2048
    $region41: #{tpu_custom_call.1} parent=1 // pred_fallthru
      _
    %s79 = sadd.s32 0, 0
    %s80 = smul.u32 2, %s79
    %p81 = scmp.lt.s32.totalorder %s80, 1
    %s82 = scalar_select %p81, %s80, 1
    %s83 = scalar_lea.vmem %s6, %s82
    %s84 = sadd.s32 0, 0
    %s85 = smul.u32 2, %s84
    %s86 = sadd.s32 0, 0
    %s87 = smul.u32 2, %s86
    %p88 = scmp.lt.s32.totalorder %s87, 1
    %s89 = scalar_select %p88, %s87, 1
    %s90 = scalar_lea.vmem %s6, %s89
    %s91 = sadd.s32 0, 0
    %s92 = smul.u32 2, %s91
    %s93 = sadd.s32 0, 0
    %s94 = smul.u32 2, %s93
    %p96 = scmp.eq.s32.totalorder 0, 0
    // Predicated region
    $region42: #{tpu_custom_call.1} parent=1 // pred_check
      %p97 = pneg %p96
    $region43: #{tpu_custom_call.1} parent=1 // pred_check_branch
      %99 = sbr.rel (%p97) target = $region45
    $region44: #{tpu_custom_call.1} parent=1 // pred_region
      %v100 = vld [vmem:[#allocation3] sm:$0xf]
      %v101 = vld [vmem:[#allocation3 + $0x4] sm:$0xf]
      %v102 = vld [vmem:[#allocation6] sm:$0xf]
      %v103 = vld [vmem:[#allocation6 + $0x4] sm:$0xf]
      %v104 = vld [vmem:[#allocation6 + $0x8] sm:$0xf]
      %v105 = vld [vmem:[#allocation6 + $0xc] sm:$0xf]
      %v106 = vld [vmem:[#allocation6 + $0x10] sm:$0xf]
      %v107 = vld [vmem:[#allocation6 + $0x14] sm:$0xf]
      %v108 = vld [vmem:[#allocation6 + $0x18] sm:$0xf]
      %v109 = vld [vmem:[#allocation6 + $0x1c] sm:$0xf]
      %v110 = vld [vmem:[#allocation6 + $0x20] sm:$0xf]
      %v111 = vld [vmem:[#allocation6 + $0x24] sm:$0xf]
      %v112 = vld [vmem:[#allocation6 + $0x28] sm:$0xf]
      %v113 = vld [vmem:[#allocation6 + $0x2c] sm:$0xf]
      %v114 = vld [vmem:[#allocation6 + $0x30] sm:$0xf]
      %v115 = vld [vmem:[#allocation6 + $0x34] sm:$0xf]
      %v116 = vld [vmem:[#allocation6 + $0x38] sm:$0xf]
      %v117 = vld [vmem:[#allocation6 + $0x3c] sm:$0xf]
      %v118 = vld [vmem:[%s2] sm:$0x1]
      %v120 = vlaneseq
      %v121 = vshrl.u32 %v120, 7
      %v122 = vsub.s32 0, %v121
      %v123 = vrot.slane %v118, %v122
      %v127 = vunpack.c.l.b16 %v100
      %v128 = vunpack.c.l.b16 %v101
      %v129 = vpack.c.b16 %v128, %v127
      %v147 = vunpack.c.l.b16 %v102
      %v148 = vunpack.c.l.b16 %v103
      %v149 = vunpack.c.l.b16 %v104
      %v150 = vunpack.c.l.b16 %v105
      %v151 = vunpack.c.l.b16 %v106
      %v152 = vunpack.c.l.b16 %v107
      %v153 = vunpack.c.l.b16 %v108
      %v154 = vunpack.c.l.b16 %v109
      %v155 = vunpack.c.l.b16 %v110
      %v156 = vunpack.c.l.b16 %v111
      %v157 = vunpack.c.l.b16 %v112
      %v158 = vunpack.c.l.b16 %v113
      %v159 = vunpack.c.l.b16 %v114
      %v160 = vunpack.c.l.b16 %v115
      %v161 = vunpack.c.l.b16 %v116
      %v162 = vunpack.c.l.b16 %v117
      %v163 = vpack.c.b16 %v148, %v147
      %v164 = vpack.c.b16 %v150, %v149
      %v165 = vpack.c.b16 %v152, %v151
      %v166 = vpack.c.b16 %v154, %v153
      %v167 = vpack.c.b16 %v156, %v155
      %v168 = vpack.c.b16 %v158, %v157
      %v169 = vpack.c.b16 %v160, %v159
      %v170 = vpack.c.b16 %v162, %v161
      %179 = vmatprep.subr.bf16.mxu0 0
      %180 = vmatpush1.bf16.msra.mxu0 %v163
      %181 = vmatprep.subr.bf16.mxu0 0
      %182 = vmatpush1.bf16.msra.mxu0 %v164
      %183 = vmatprep.subr.bf16.mxu0 0
      %184 = vmatpush1.bf16.msra.mxu0 %v165
      %185 = vmatprep.subr.bf16.mxu0 0
      %186 = vmatpush1.bf16.msra.mxu0 %v166
      %187 = vmatprep.subr.bf16.mxu0 0
      %188 = vmatpush1.bf16.msra.mxu0 %v167
      %189 = vmatprep.subr.bf16.mxu0 0
      %190 = vmatpush1.bf16.msra.mxu0 %v168
      %191 = vmatprep.subr.bf16.mxu0 0
      %192 = vmatpush1.bf16.msra.mxu0 %v169
      %193 = vmatprep.subr.bf16.mxu0 0
      %194 = vmatpush1.bf16.msra.mxu0 %v170
      %195 = vmatprep.subr.bf16.mxu0 0
      %196 = vmatpush1.bf16.msra.mxu0 0
      %197 = vmatprep.subr.bf16.mxu0 0
      %198 = vmatpush1.bf16.msra.mxu0 0
      %199 = vmatprep.subr.bf16.mxu0 0
      %200 = vmatpush1.bf16.msra.mxu0 0
      %201 = vmatprep.subr.bf16.mxu0 0
      %202 = vmatpush1.bf16.msra.mxu0 0
      %203 = vmatprep.subr.bf16.mxu0 0
      %204 = vmatpush1.bf16.msra.mxu0 0
      %205 = vmatprep.subr.bf16.mxu0 0
      %206 = vmatpush1.bf16.msra.mxu0 0
      %207 = vmatprep.subr.bf16.mxu0 0
      %208 = vmatpush1.bf16.msra.mxu0 0
      %209 = vmatprep.subr.bf16.mxu0 0
      %210 = vmatpush1.bf16.msra.mxu0 0
      %211 = vmatprep.mubr.bf16.mxu0 0
      %212 = vmatmul.mubr.bf16.gmra.mrb[0].mxu0 %v129
      %v213 = vpop.f32.mrb[0].mxu0
      %v214 = vadd.f32 %v123, %v213
      %v215 = vpop.f32.mrb[0].mxu0
      %v216 = vpop.f32.mrb[0].mxu0
      %v217 = vadd.f32 %v123, %v216
      %v218 = vpop.f32.mrb[0].mxu0
      %219 = vdwg.mxu0
      %v220 = vmul.f32 %v214, 0.5
      %v221 = vmul.f32 %v217, 0.5
      %v222 = vmul.f32 %v214, 0.70710677
      %v223 = vmul.f32 %v217, 0.70710677
      %v224 = verf.f32.pop %v222
      %v225 = verf.f32.pop %v223
      %v226 = vadd.f32 %v224, 1.0
      %v227 = vadd.f32 %v225, 1.0
      %v228 = vmul.f32 %v220, %v226
      %v229 = vmul.f32 %v221, %v227
      %230 = vadd.xlane.f32.xlu0 %v228
      %v231 = vpop.xlane.xlu0 %230
      %232 = vadd.xlane.f32.xlu0 %v229
      %v233 = vpop.xlane.xlu0 %232
      %v234 = vrcp.pop 128.0
      %v235 = vmul.f32 %v231, %v234
      %v236 = vmul.f32 %v233, %v234
      %v237 = vsub.f32 %v228, %v235
      %v238 = vsub.f32 %v229, %v236
      %v239 = vmul.f32 %v237, %v237
      %v240 = vmul.f32 %v238, %v238
      %241 = vadd.xlane.f32.xlu0 %v239
      %v242 = vpop.xlane.xlu0 %241
      %243 = vadd.xlane.f32.xlu0 %v240
      %v244 = vpop.xlane.xlu0 %243
      %v245 = vmul.f32 %v242, %v234
      %v246 = vmul.f32 %v244, %v234
      %v247 = vadd.f32 %v245, 1e-05
      %v248 = vadd.f32 %v246, 1e-05
      %v249 = vrsqrt.pop %v247
      %v250 = vrsqrt.pop %v248
      %v251 = vmul.f32 %v237, %v249
      %v252 = vmul.f32 %v238, %v250
      %v253 = vld [vmem:[%s3] sm:$0x1]
      %v255 = vlaneseq
      %v256 = vshrl.u32 %v255, 7
      %v257 = vsub.s32 0, %v256
      %v258 = vrot.slane %v253, %v257
      %v260 = vmul.f32 %v251, %v258
      %v261 = vmul.f32 %v252, %v258
      %v262 = vld [vmem:[%s4] sm:$0x1]
      %v264 = vlaneseq
      %v265 = vshrl.u32 %v264, 7
      %v266 = vsub.s32 0, %v265
      %v267 = vrot.slane %v262, %v266
      %v269 = vadd.f32 %v260, %v267
      %v270 = vadd.f32 %v261, %v267
      %v271 = vpack.c.bf16 %v270, %v269
      %272 = vst [vmem:[#allocation2] sm:$0xff] %v271
    $region45: #{tpu_custom_call.1} parent=1 // pred_fallthru
      _
    %v273 = vld [vmem:[#allocation2] sm:$0xff]
    %v274 = vld [vmem:[#allocation8] sm:$0xff]
    %v275 = vld [vmem:[#allocation8 + $0x8] sm:$0xff]
    %v276 = vld [vmem:[#allocation8 + $0x10] sm:$0xff]
    %v277 = vld [vmem:[#allocation8 + $0x18] sm:$0xff]
    %v278 = vld [vmem:[#allocation8 + $0x20] sm:$0xff]
    %v279 = vld [vmem:[#allocation8 + $0x28] sm:$0xff]
    %v280 = vld [vmem:[#allocation8 + $0x30] sm:$0xff]
    %v281 = vld [vmem:[#allocation8 + $0x38] sm:$0xff]
    %v282 = vld [vmem:[#allocation8 + $0x40] sm:$0xff]
    %v283 = vld [vmem:[#allocation8 + $0x48] sm:$0xff]
    %v284 = vld [vmem:[#allocation8 + $0x50] sm:$0xff]
    %v285 = vld [vmem:[#allocation8 + $0x58] sm:$0xff]
    %v286 = vld [vmem:[#allocation8 + $0x60] sm:$0xff]
    %v287 = vld [vmem:[#allocation8 + $0x68] sm:$0xff]
    %v288 = vld [vmem:[#allocation8 + $0x70] sm:$0xff]
    %v289 = vld [vmem:[#allocation8 + $0x78] sm:$0xff]
    %v290 = vld [vmem:[%s90] sm:$0x3]
    %v292 = vlaneseq
    %v293 = vshrl.u32 %v292, 7
    %v294 = vsub.s32 0, %v293
    %v295 = vrot.slane %v290, %v294
    %v296 = vlaneseq
    %v297 = vshrl.u32 %v296, 7
    %v298 = vsub.s32 1, %v297
    %v299 = vrot.slane %v290, %v298
    %v318 = vunpack.c.l.b16 %v274
    %v319 = vunpack.c.h.b16 %v274
    %v320 = vunpack.c.l.b16 %v275
    %v321 = vunpack.c.h.b16 %v275
    %v322 = vunpack.c.l.b16 %v276
    %v323 = vunpack.c.h.b16 %v276
    %v324 = vunpack.c.l.b16 %v277
    %v325 = vunpack.c.h.b16 %v277
    %v326 = vunpack.c.l.b16 %v278
    %v327 = vunpack.c.h.b16 %v278
    %v328 = vunpack.c.l.b16 %v279
    %v329 = vunpack.c.h.b16 %v279
    %v330 = vunpack.c.l.b16 %v280
    %v331 = vunpack.c.h.b16 %v280
    %v332 = vunpack.c.l.b16 %v281
    %v333 = vunpack.c.h.b16 %v281
    %v334 = vunpack.c.l.b16 %v282
    %v335 = vunpack.c.h.b16 %v282
    %v336 = vunpack.c.l.b16 %v283
    %v337 = vunpack.c.h.b16 %v283
    %v338 = vunpack.c.l.b16 %v284
    %v339 = vunpack.c.h.b16 %v284
    %v340 = vunpack.c.l.b16 %v285
    %v341 = vunpack.c.h.b16 %v285
    %v342 = vunpack.c.l.b16 %v286
    %v343 = vunpack.c.h.b16 %v286
    %v344 = vunpack.c.l.b16 %v287
    %v345 = vunpack.c.h.b16 %v287
    %v346 = vunpack.c.l.b16 %v288
    %v347 = vunpack.c.h.b16 %v288
    %v348 = vunpack.c.l.b16 %v289
    %v349 = vunpack.c.h.b16 %v289
    %v350 = vpack.c.b16 %v320, %v318
    %v351 = vpack.c.b16 %v321, %v319
    %v352 = vpack.c.b16 %v324, %v322
    %v353 = vpack.c.b16 %v325, %v323
    %v354 = vpack.c.b16 %v328, %v326
    %v355 = vpack.c.b16 %v329, %v327
    %v356 = vpack.c.b16 %v332, %v330
    %v357 = vpack.c.b16 %v333, %v331
    %v358 = vpack.c.b16 %v336, %v334
    %v359 = vpack.c.b16 %v337, %v335
    %v360 = vpack.c.b16 %v340, %v338
    %v361 = vpack.c.b16 %v341, %v339
    %v362 = vpack.c.b16 %v344, %v342
    %v363 = vpack.c.b16 %v345, %v343
    %v364 = vpack.c.b16 %v348, %v346
    %v365 = vpack.c.b16 %v349, %v347
    %382 = vmatprep.subr.bf16.mxu0 %v351
    %383 = vmatpush1.bf16.msra.mxu0 %v350
    %384 = vmatprep.subr.bf16.mxu0 %v353
    %385 = vmatpush1.bf16.msra.mxu0 %v352
    %386 = vmatprep.subr.bf16.mxu0 %v355
    %387 = vmatpush1.bf16.msra.mxu0 %v354
    %388 = vmatprep.subr.bf16.mxu0 %v357
    %389 = vmatpush1.bf16.msra.mxu0 %v356
    %390 = vmatprep.subr.bf16.mxu0 %v359
    %391 = vmatpush1.bf16.msra.mxu0 %v358
    %392 = vmatprep.subr.bf16.mxu0 %v361
    %393 = vmatpush1.bf16.msra.mxu0 %v360
    %394 = vmatprep.subr.bf16.mxu0 %v363
    %395 = vmatpush1.bf16.msra.mxu0 %v362
    %396 = vmatprep.subr.bf16.mxu0 %v365
    %397 = vmatpush1.bf16.msra.mxu0 %v364
    %398 = vmatprep.subr.bf16.mxu0 0
    %399 = vmatpush1.bf16.msra.mxu0 0
    %400 = vmatprep.subr.bf16.mxu0 0
    %401 = vmatpush1.bf16.msra.mxu0 0
    %402 = vmatprep.subr.bf16.mxu0 0
    %403 = vmatpush1.bf16.msra.mxu0 0
    %404 = vmatprep.subr.bf16.mxu0 0
    %405 = vmatpush1.bf16.msra.mxu0 0
    %406 = vmatprep.subr.bf16.mxu0 0
    %407 = vmatpush1.bf16.msra.mxu0 0
    %408 = vmatprep.subr.bf16.mxu0 0
    %409 = vmatpush1.bf16.msra.mxu0 0
    %410 = vmatprep.subr.bf16.mxu0 0
    %411 = vmatpush1.bf16.msra.mxu0 0
    %412 = vmatprep.subr.bf16.mxu0 0
    %413 = vmatpush1.bf16.msra.mxu0 0
    %414 = vmatprep.mubr.bf16.mxu0 0
    %415 = vmatmul.mubr.bf16.gmra.mrb[0].mxu0 %v273
    %v416 = vpop.f32.mrb[0].mxu0
    %v417 = vadd.f32 %v295, %v416
    %v418 = vpop.f32.mrb[0].mxu0
    %v419 = vadd.f32 %v299, %v418
    %v420 = vpop.f32.mrb[0].mxu0
    %v421 = vadd.f32 %v295, %v420
    %v422 = vpop.f32.mrb[0].mxu0
    %v423 = vadd.f32 %v299, %v422
    %424 = vdwg.mxu0
    %425 = vst [vmem:[#allocation9] sm:$0xff] %v417
    %426 = vst [vmem:[#allocation9 + $0x8] sm:$0xff] %v419
    %427 = vst [vmem:[#allocation9 + $0x10] sm:$0xff] %v421
    %428 = vst [vmem:[#allocation9 + $0x18] sm:$0xff] %v423
    // Predicated region
    $region46: #{tpu_custom_call.1} parent=1 // pred_check
      _
    $region47: #{tpu_custom_call.1} parent=1 // pred_check_branch
      %430 = sbr.rel (0) target = $region49
    $region48: #{tpu_custom_call.1} parent=1 // pred_region
      %s431 = sadd.s32 0, 0
      %s432 = smul.u32 2, %s431
      %s434 = ssub.s32 512, 512
      %435 = vsyncadd [#allocation5], %s434
      %s436 = smul.addr %s432, 128
      %s437 = scalar_lea.hbm %s7, %s436
      %s438 = sshll.u32 [#allocation9], 4
      %s439 = int_to_ptr.vmem [resolvable:$true] %s438
      %444 = dma.vmem_to_hbm [thread:$0]  %s439, 512, %s437, [#allocation5], 256, 256, 16
    $region49: #{tpu_custom_call.1} parent=1 // pred_fallthru
      _
    // Predicated region
    $region50: #{tpu_custom_call.1} parent=1 // pred_check
      _
    $region51: #{tpu_custom_call.1} parent=1 // pred_check_branch
      %446 = sbr.rel (0) target = $region53
    $region52: #{tpu_custom_call.1} parent=1 // pred_region
      %447 = dma.done [#allocation5], 512
    $region53: #{tpu_custom_call.1} parent=1 // pred_fallthru
      _
    %448 = vsyncpa [#allocation4], 1
    %449 = vsyncpa [#allocation7], 1
    %450 = vsyncpa [#allocation5], 1

</llo_original>
